<compile_context>
chip_gen: v7x
topology: tpu7x:2x2x1
jax: 0.10.0
libtpu: 0.0.40
codegen_flags: <defaults>
</compile_context>

<pallas_src>
import jax
import jax.numpy as jnp
from jax.experimental import pallas as pl
from jax.experimental.pallas import tpu as pltpu


_LANE = 128


def _round_up(n, m):
    return ((n + m - 1) // m) * m


def _dqn_kernel(x_ref, w1_ref, b1_ref, w2_ref, b2_ref,
                w3_ref, b3_ref, w4_ref, b4_ref, o_ref):
    # bf16 MXU operands with f32 accumulation; bias-add + ReLU in f32,
    # down-cast to bf16 only for the next matmul input / the final store.
    h = jnp.dot(x_ref[...], w1_ref[...], preferred_element_type=jnp.float32)
    h = jnp.maximum(h + b1_ref[...], 0.0).astype(jnp.bfloat16)

    h = jnp.dot(h, w2_ref[...], preferred_element_type=jnp.float32)
    h = jnp.maximum(h + b2_ref[...], 0.0).astype(jnp.bfloat16)

    h = jnp.dot(h, w3_ref[...], preferred_element_type=jnp.float32)
    h = jnp.maximum(h + b3_ref[...], 0.0).astype(jnp.bfloat16)

    o = jnp.dot(h, w4_ref[...], preferred_element_type=jnp.float32)
    o_ref[...] = (o + b4_ref[...]).astype(o_ref.dtype)


def dqn_forward(x, params, action_dim, *, batch_tile=512):
    """x: [B, state_dim]. params: dict of [in, out] bf16 weights and (1, out)
    f32 biases (final layer pre-padded to 128 lanes). Returns [B, action_dim]
    float32 Q-values."""
    w1, b1 = params["w1"], params["b1"]
    w2, b2 = params["w2"], params["b2"]
    w3, b3 = params["w3"], params["b3"]
    w4, b4 = params["w4"], params["b4"]

    B, state_dim = x.shape
    # bf16 activations into the MXU: halves the x HBM->VMEM stream.
    x = x.astype(jnp.bfloat16)

    # Lane-dense output (normally pre-padded in init; static-shape fallback).
    out_pad = _round_up(action_dim, _LANE)
    if w4.shape[1] != out_pad:
        w4 = jnp.pad(w4, ((0, 0), (0, out_pad - w4.shape[1])))
        b4 = jnp.pad(b4, ((0, 0), (0, out_pad - b4.shape[1])))

    # Batch tiling: single tile for small batches; for larger batches use big
    # tiles (fewer per-grid-step overheads) but always >= 2 steps so v7x's two
    # TensorCores both get work.
    batch_tile = max(256, _round_up(batch_tile, 256))
    b_min = _round_up(max(B, 1), 16)          # 16: bf16 sublane packing (v5e)
    if b_min <= 256:
        tile = b_min
        B_pad = b_min
    else:
        half = _round_up(-(-b_min // 2), 256)
        tile = min(batch_tile, half)
        B_pad = _round_up(B, tile)
    if B_pad != B:
        x = jnp.pad(x, ((0, B_pad - B), (0, 0)))
    num_tiles = B_pad // tile

    # Deeper pipelining of the x / out streams only when the grid is long
    # enough for a 3rd buffer to matter.
    bufs = 3 if num_tiles >= 3 else None

    def whole(arr):
        # Whole array resident in VMEM: constant block index => DMA'd once.
        return pl.BlockSpec(arr.shape, lambda i: (0, 0))

    def io_spec(shape, index_map, nbuf):
        if nbuf is not None and hasattr(pl, "Buffered"):
            try:
                return pl.BlockSpec(shape, index_map,
                                    pipeline_mode=pl.Buffered(nbuf))
            except TypeError:
                pass
        return pl.BlockSpec(shape, index_map)

    def make_call(nbuf):
        return pl.pallas_call(
            _dqn_kernel,
            out_shape=jax.ShapeDtypeStruct((B_pad, out_pad), jnp.bfloat16),
            grid_spec=pltpu.PrefetchScalarGridSpec(
                num_scalar_prefetch=0,
                grid=(num_tiles,),
                in_specs=[
                    io_spec((tile, state_dim), lambda i: (i, 0), nbuf),  # x
                    whole(w1), whole(b1),
                    whole(w2), whole(b2),
                    whole(w3), whole(b3),
                    whole(w4), whole(b4),
                ],
                out_specs=io_spec((tile, out_pad), lambda i: (i, 0), nbuf),
            ),
            compiler_params=pltpu.CompilerParams(
                dimension_semantics=("parallel",)),
        )

    args = (x, w1, b1, w2, b2, w3, b3, w4, b4)
    try:
        out = make_call(bufs)(*args)
    except Exception:
        if bufs is None:
            raise
        # Fall back to default double-buffering if Buffered(3) is unsupported.
        out = make_call(None)(*args)

    # Drop batch padding + zero-padded action columns; result is tiny, so the
    # final up-cast to f32 is negligible.
    return out[:B, :action_dim].astype(jnp.float32)


def init_dqn_params(key, state_dim, action_dim):
    """Kaiming-normal (fan_in, relu gain) weights, zero biases, matching the
    PyTorch __init__. Weights stored pre-transposed as [in, out] in bf16; the
    final layer is pre-padded once to a full 128-lane width (padded columns
    stay exactly zero)."""
    dims = [(state_dim, 128), (128, 256), (256, 128), (128, action_dim)]
    params = {}
    keys = jax.random.split(key, len(dims))
    for n, (k, (fan_in, fan_out)) in enumerate(zip(keys, dims), start=1):
        std = jnp.sqrt(2.0 / fan_in)  # kaiming_normal_, nonlinearity='relu'
        w = std * jax.random.normal(k, (fan_in, fan_out), dtype=jnp.float32)
        b = jnp.zeros((1, fan_out), dtype=jnp.float32)
        if n == len(dims):            # lane-dense final layer
            pad = _round_up(fan_out, _LANE) - fan_out
            if pad:
                w = jnp.pad(w, ((0, 0), (0, pad)))
                b = jnp.pad(b, ((0, 0), (0, pad)))
        params[f"w{n}"] = w.astype(jnp.bfloat16)
        params[f"b{n}"] = b
    return params


def dqn_reference(x, params, action_dim):
    """Pure-JAX reference mirroring the kernel's bf16-in / f32-accum math and
    bf16 output store."""
    h = jnp.dot(x.astype(jnp.bfloat16), params["w1"],
                preferred_element_type=jnp.float32) + params["b1"]
    h = jnp.maximum(h, 0.0).astype(jnp.bfloat16)
    h = jnp.dot(h, params["w2"],
                preferred_element_type=jnp.float32) + params["b2"]
    h = jnp.maximum(h, 0.0).astype(jnp.bfloat16)
    h = jnp.dot(h, params["w3"],
                preferred_element_type=jnp.float32) + params["b3"]
    h = jnp.maximum(h, 0.0).astype(jnp.bfloat16)
    o = jnp.dot(h, params["w4"],
                preferred_element_type=jnp.float32) + params["b4"]
    return o[:, :action_dim].astype(jnp.bfloat16).astype(jnp.float32)


if __name__ == "__main__":
    state_dim = 16
    action_dim = 4

    key = jax.random.PRNGKey(0)
    k_param, k1, k2, k3 = jax.random.split(key, 4)
    params = init_dqn_params(k_param, state_dim, action_dim)

    def check(name, x, **kw):
        out = jax.block_until_ready(dqn_forward(x, params, action_dim, **kw))
        ref = dqn_reference(x, params, action_dim)
        assert out.shape == (x.shape[0], action_dim), (name, out.shape)
        err = float(jnp.max(jnp.abs(out - ref)))
        assert jnp.allclose(out, ref, atol=2e-2, rtol=2e-2), (name, err)

    # Small batch: single-tile (grid=(1,)) fast path.
    check("small", jax.random.normal(k1, (2, state_dim), dtype=jnp.float32))

    # Medium batch: 2-step parallel grid (v7x dual-TC path) + batch padding.
    check("medium", jax.random.normal(k2, (300, state_dim), dtype=jnp.float32))

    # Large batch: >= 3 tiles, exercises the Buffered(3) pipelined path.
    check("large", jax.random.normal(k3, (1200, state_dim), dtype=jnp.float32),
          batch_tile=256)

    print("KERNEL_OK")
</pallas_src>

<mosaic_0001>
module attributes {stable_mosaic.version = 11 : i64} {
  func.func @_dqn_kernel(%arg0: i32, %arg1: memref<16x16xbf16, #tpu.memory_space<vmem>>, %arg2: memref<16x128xbf16, #tpu.memory_space<vmem>>, %arg3: memref<1x128xf32, #tpu.memory_space<vmem>>, %arg4: memref<128x256xbf16, #tpu.memory_space<vmem>>, %arg5: memref<1x256xf32, #tpu.memory_space<vmem>>, %arg6: memref<256x128xbf16, #tpu.memory_space<vmem>>, %arg7: memref<1x128xf32, #tpu.memory_space<vmem>>, %arg8: memref<128x128xbf16, #tpu.memory_space<vmem>>, %arg9: memref<1x128xf32, #tpu.memory_space<vmem>>, %arg10: memref<16x128xbf16, #tpu.memory_space<vmem>>) attributes {dimension_semantics = [#tpu.dimension_semantics<parallel>], iteration_bounds = array<i64: 1>, scalar_prefetch = 0 : i64, scratch_operands = 0 : i64, tpu.core_type = #tpu.core_type<tc>, window_params = [{transform_indices = @transform_0, window_bounds = array<i64: 16, 16>}, {pipeline_mode = #tpu.pipeline_mode<synchronous>, transform_indices = @transform_1, window_bounds = array<i64: 16, 128>}, {pipeline_mode = #tpu.pipeline_mode<synchronous>, transform_indices = @transform_2, window_bounds = array<i64: 1, 128>}, {pipeline_mode = #tpu.pipeline_mode<synchronous>, transform_indices = @transform_3, window_bounds = array<i64: 128, 256>}, {pipeline_mode = #tpu.pipeline_mode<synchronous>, transform_indices = @transform_4, window_bounds = array<i64: 1, 256>}, {pipeline_mode = #tpu.pipeline_mode<synchronous>, transform_indices = @transform_5, window_bounds = array<i64: 256, 128>}, {pipeline_mode = #tpu.pipeline_mode<synchronous>, transform_indices = @transform_6, window_bounds = array<i64: 1, 128>}, {pipeline_mode = #tpu.pipeline_mode<synchronous>, transform_indices = @transform_7, window_bounds = array<i64: 128, 128>}, {pipeline_mode = #tpu.pipeline_mode<synchronous>, transform_indices = @transform_8, window_bounds = array<i64: 1, 128>}, {transform_indices = @transform_9, window_bounds = array<i64: 16, 128>}]} {
    %c0 = arith.constant 0 : index
    %c0_0 = arith.constant 0 : index
    %0 = vector.load %arg1[%c0, %c0_0] : memref<16x16xbf16, #tpu.memory_space<vmem>>, vector<16x16xbf16>
    %c0_1 = arith.constant 0 : index
    %c0_2 = arith.constant 0 : index
    %1 = vector.load %arg2[%c0_1, %c0_2] : memref<16x128xbf16, #tpu.memory_space<vmem>>, vector<16x128xbf16>
    %cst = arith.constant dense<0.000000e+00> : vector<16x128xf32>
    %2 = tpu.matmul %0, %1, %cst {dimension_numbers = #tpu.dot_dimension_numbers<[1], [0], [0], [1], [0, 0, 1, 1], [], []>} : vector<16x16xbf16>, vector<16x128xbf16>, vector<16x128xf32> -> vector<16x128xf32>
    %c0_3 = arith.constant 0 : index
    %c0_4 = arith.constant 0 : index
    %3 = vector.load %arg3[%c0_3, %c0_4] : memref<1x128xf32, #tpu.memory_space<vmem>>, vector<1x128xf32>
    %4 = vector.broadcast %3 : vector<1x128xf32> to vector<16x128xf32>
    %5 = arith.addf %2, %4 : vector<16x128xf32>
    %cst_5 = arith.constant 0.000000e+00 : f32
    %6 = vector.broadcast %cst_5 : f32 to vector<16x128xf32>
    %7 = arith.maximumf %5, %6 : vector<16x128xf32>
    %8 = arith.truncf %7 : vector<16x128xf32> to vector<16x128xbf16>
    %c0_6 = arith.constant 0 : index
    %c0_7 = arith.constant 0 : index
    %9 = vector.load %arg4[%c0_6, %c0_7] : memref<128x256xbf16, #tpu.memory_space<vmem>>, vector<128x256xbf16>
    %cst_8 = arith.constant dense<0.000000e+00> : vector<16x256xf32>
    %10 = tpu.matmul %8, %9, %cst_8 {dimension_numbers = #tpu.dot_dimension_numbers<[1], [0], [0], [1], [0, 0, 1, 1], [], []>} : vector<16x128xbf16>, vector<128x256xbf16>, vector<16x256xf32> -> vector<16x256xf32>
    %c0_9 = arith.constant 0 : index
    %c0_10 = arith.constant 0 : index
    %11 = vector.load %arg5[%c0_9, %c0_10] : memref<1x256xf32, #tpu.memory_space<vmem>>, vector<1x256xf32>
    %12 = vector.broadcast %11 : vector<1x256xf32> to vector<16x256xf32>
    %13 = arith.addf %10, %12 : vector<16x256xf32>
    %cst_11 = arith.constant 0.000000e+00 : f32
    %14 = vector.broadcast %cst_11 : f32 to vector<16x256xf32>
    %15 = arith.maximumf %13, %14 : vector<16x256xf32>
    %16 = arith.truncf %15 : vector<16x256xf32> to vector<16x256xbf16>
    %c0_12 = arith.constant 0 : index
    %c0_13 = arith.constant 0 : index
    %17 = vector.load %arg6[%c0_12, %c0_13] : memref<256x128xbf16, #tpu.memory_space<vmem>>, vector<256x128xbf16>
    %cst_14 = arith.constant dense<0.000000e+00> : vector<16x128xf32>
    %18 = tpu.matmul %16, %17, %cst_14 {dimension_numbers = #tpu.dot_dimension_numbers<[1], [0], [0], [1], [0, 0, 1, 1], [], []>} : vector<16x256xbf16>, vector<256x128xbf16>, vector<16x128xf32> -> vector<16x128xf32>
    %c0_15 = arith.constant 0 : index
    %c0_16 = arith.constant 0 : index
    %19 = vector.load %arg7[%c0_15, %c0_16] : memref<1x128xf32, #tpu.memory_space<vmem>>, vector<1x128xf32>
    %20 = vector.broadcast %19 : vector<1x128xf32> to vector<16x128xf32>
    %21 = arith.addf %18, %20 : vector<16x128xf32>
    %cst_17 = arith.constant 0.000000e+00 : f32
    %22 = vector.broadcast %cst_17 : f32 to vector<16x128xf32>
    %23 = arith.maximumf %21, %22 : vector<16x128xf32>
    %24 = arith.truncf %23 : vector<16x128xf32> to vector<16x128xbf16>
    %c0_18 = arith.constant 0 : index
    %c0_19 = arith.constant 0 : index
    %25 = vector.load %arg8[%c0_18, %c0_19] : memref<128x128xbf16, #tpu.memory_space<vmem>>, vector<128x128xbf16>
    %cst_20 = arith.constant dense<0.000000e+00> : vector<16x128xf32>
    %26 = tpu.matmul %24, %25, %cst_20 {dimension_numbers = #tpu.dot_dimension_numbers<[1], [0], [0], [1], [0, 0, 1, 1], [], []>} : vector<16x128xbf16>, vector<128x128xbf16>, vector<16x128xf32> -> vector<16x128xf32>
    %c0_21 = arith.constant 0 : index
    %c0_22 = arith.constant 0 : index
    %27 = vector.load %arg9[%c0_21, %c0_22] : memref<1x128xf32, #tpu.memory_space<vmem>>, vector<1x128xf32>
    %28 = vector.broadcast %27 : vector<1x128xf32> to vector<16x128xf32>
    %29 = arith.addf %26, %28 : vector<16x128xf32>
    %30 = arith.truncf %29 : vector<16x128xf32> to vector<16x128xbf16>
    %c0_23 = arith.constant 0 : index
    %c0_24 = arith.constant 0 : index
    %31 = vector.load %arg10[%c0_23, %c0_24] : memref<16x128xbf16, #tpu.memory_space<vmem>>, vector<16x128xbf16>
    tpu.vector_store %arg10[%c0_23, %c0_24], %30 {strides = array<i32>} : memref<16x128xbf16, #tpu.memory_space<vmem>>, vector<16x128xbf16>,
    return
  }
  func.func @transform_0(%arg0: i32) -> (i32, i32) {
    %c0_i32 = arith.constant 0 : i32
    %c0_i32_0 = arith.constant 0 : i32
    return %arg0, %c0_i32 : i32, i32
  }
  func.func @transform_1(%arg0: i32) -> (i32, i32) {
    %c0_i32 = arith.constant 0 : i32
    %c0_i32_0 = arith.constant 0 : i32
    %c0_i32_1 = arith.constant 0 : i32
    return %c0_i32, %c0_i32_0 : i32, i32
  }
  func.func @transform_2(%arg0: i32) -> (i32, i32) {
    %c0_i32 = arith.constant 0 : i32
    %c0_i32_0 = arith.constant 0 : i32
    %c0_i32_1 = arith.constant 0 : i32
    return %c0_i32, %c0_i32_0 : i32, i32
  }
  func.func @transform_3(%arg0: i32) -> (i32, i32) {
    %c0_i32 = arith.constant 0 : i32
    %c0_i32_0 = arith.constant 0 : i32
    %c0_i32_1 = arith.constant 0 : i32
    return %c0_i32, %c0_i32_0 : i32, i32
  }
  func.func @transform_4(%arg0: i32) -> (i32, i32) {
    %c0_i32 = arith.constant 0 : i32
    %c0_i32_0 = arith.constant 0 : i32
    %c0_i32_1 = arith.constant 0 : i32
    return %c0_i32, %c0_i32_0 : i32, i32
  }
  func.func @transform_5(%arg0: i32) -> (i32, i32) {
    %c0_i32 = arith.constant 0 : i32
    %c0_i32_0 = arith.constant 0 : i32
    %c0_i32_1 = arith.constant 0 : i32
    return %c0_i32, %c0_i32_0 : i32, i32
  }
  func.func @transform_6(%arg0: i32) -> (i32, i32) {
    %c0_i32 = arith.constant 0 : i32
    %c0_i32_0 = arith.constant 0 : i32
    %c0_i32_1 = arith.constant 0 : i32
    return %c0_i32, %c0_i32_0 : i32, i32
  }
  func.func @transform_7(%arg0: i32) -> (i32, i32) {
    %c0_i32 = arith.constant 0 : i32
    %c0_i32_0 = arith.constant 0 : i32
    %c0_i32_1 = arith.constant 0 : i32
    return %c0_i32, %c0_i32_0 : i32, i32
  }
  func.func @transform_8(%arg0: i32) -> (i32, i32) {
    %c0_i32 = arith.constant 0 : i32
    %c0_i32_0 = arith.constant 0 : i32
    %c0_i32_1 = arith.constant 0 : i32
    return %c0_i32, %c0_i32_0 : i32, i32
  }
  func.func @transform_9(%arg0: i32) -> (i32, i32) {
    %c0_i32 = arith.constant 0 : i32
    %c0_i32_0 = arith.constant 0 : i32
    return %arg0, %c0_i32 : i32, i32
  }
}

</mosaic_0001>

<llo_original>
// kernel: tpu_custom_call.1
$region0: #{tpu_custom_call.1}
  #allocation0 [shape = 'u32[]', space=smem, size = 0x4, offset = 0x4, fixed_abs, tag = 'smem constant byte address 0x4 - core index']
  #allocation1 [shape = 'u32[144,128]{1,0:T(1,128)}', space=vmem, size = 0x12000, scoped, tag = 'internal scratch']
  %s0 = inlined_call_operand.hbm [shape: bf16[16,16], index: 0, kind: input, shape index: {}]
  %s1 = inlined_call_operand.hbm [shape: bf16[16,128], index: 1, kind: input, shape index: {}]
  %s2 = inlined_call_operand.vmem [shape: f32[1,128], index: 2, kind: input, shape index: {}]
  %s3 = inlined_call_operand.hbm [shape: bf16[128,256], index: 3, kind: input, shape index: {}]
  %s4 = inlined_call_operand.vmem [shape: f32[1,256], index: 4, kind: input, shape index: {}]
  %s5 = inlined_call_operand.hbm [shape: bf16[256,128], index: 5, kind: input, shape index: {}]
  %s6 = inlined_call_operand.vmem [shape: f32[1,128], index: 6, kind: input, shape index: {}]
  %s7 = inlined_call_operand.hbm [shape: bf16[128,128], index: 7, kind: input, shape index: {}]
  %s8 = inlined_call_operand.vmem [shape: f32[1,128], index: 8, kind: input, shape index: {}]
  %s9 = inlined_call_operand.hbm [shape: bf16[16,128], index: 9, kind: output, shape index: {}]
  %s10 = sld [smem:[#allocation0]]
  $region66: #{tpu_custom_call.1} parent=0
    _
  %s12 = ssub.s32 1, %s10
  %s13 = scalar_select 0, %s12, %s10
  $region1: #{tpu_custom_call.1} parent=0
    #allocation2 [shape = 'u8[4096]{0}', space=vmem, size = 0x1000, scoped, tag = 'input window, operand 0, single buffered']
    #allocation3 [shape = 's32[1]{0}', space=sflag, size = 0x4, scoped, tag = 'scoped memory for tpu_custom_call.1']
    #allocation4 [shape = 's32[1]{0}', space=sflag, size = 0x4, scoped, tag = 'scoped memory for tpu_custom_call.1']
    #allocation5 [shape = 'u8[4096]{0}', space=vmem, size = 0x1000, scoped, tag = 'input window, operand 1, single buffered']
    #allocation6 [shape = 's32[1]{0}', space=sflag, size = 0x4, scoped, tag = 'scoped memory for tpu_custom_call.1']
    #allocation7 [shape = 'u8[65536]{0}', space=vmem, size = 0x10000, scoped, tag = 'input window, operand 3, single buffered']
    #allocation8 [shape = 'u8[65536]{0}', space=vmem, size = 0x10000, scoped, tag = 'input window, operand 5, single buffered']
    #allocation9 [shape = 's32[1]{0}', space=sflag, size = 0x4, scoped, tag = 'scoped memory for tpu_custom_call.1']
    #allocation10 [shape = 'u8[32768]{0}', space=vmem, size = 0x8000, scoped, tag = 'input window, operand 7, single buffered']
    #allocation11 [shape = 'u8[4096]{0}', space=vmem, size = 0x1000, scoped, tag = 'output window, operand 0, single buffered']
    %14 = vsyncpa [#allocation3], 0
    %15 = vsyncpa [#allocation6], 0
    %16 = vsyncpa [#allocation9], 0
    %17 = vsyncpa [#allocation4], 0
    // Predicated region
    $region2: #{tpu_custom_call.1} parent=1 // pred_check
      _
    $region3: #{tpu_custom_call.1} parent=1 // pred_check_branch
      %19 = sbr.rel (0) target = $region5
    $region4: #{tpu_custom_call.1} parent=1 // pred_region
      %s21 = ssub.s32 128, 128
      %22 = vsyncadd [#allocation3], %s21
      %s23 = sshll.u32 [#allocation2], 4
      %s24 = int_to_ptr.vmem [resolvable:$true] %s23
      %29 = dma.hbm_to_vmem [thread:$0]  %s0, 128, %s24, [#allocation3], 64, 64, 4
    $region5: #{tpu_custom_call.1} parent=1 // pred_fallthru
      _
    // Predicated region
    $region6: #{tpu_custom_call.1} parent=1 // pred_check
      _
    $region7: #{tpu_custom_call.1} parent=1 // pred_check_branch
      %31 = sbr.rel (0) target = $region9
    $region8: #{tpu_custom_call.1} parent=1 // pred_region
      %s33 = ssub.s32 128, 128
      %34 = vsyncadd [#allocation6], %s33
      %s35 = sshll.u32 [#allocation5], 4
      %s36 = int_to_ptr.vmem [resolvable:$true] %s35
      %41 = dma.hbm_to_vmem [thread:$0]  %s1, 128, %s36, [#allocation6], 64, 64, 4
    $region9: #{tpu_custom_call.1} parent=1 // pred_fallthru
      _
    // Predicated region
    $region10: #{tpu_custom_call.1} parent=1 // pred_check
      _
    $region11: #{tpu_custom_call.1} parent=1 // pred_check_branch
      %43 = sbr.rel (0) target = $region13
    $region12: #{tpu_custom_call.1} parent=1 // pred_region
      _
    $region13: #{tpu_custom_call.1} parent=1 // pred_fallthru
      _
    // Predicated region
    $region14: #{tpu_custom_call.1} parent=1 // pred_check
      _
    $region15: #{tpu_custom_call.1} parent=1 // pred_check_branch
      %45 = sbr.rel (0) target = $region17
    $region16: #{tpu_custom_call.1} parent=1 // pred_region
      %s47 = ssub.s32 2048, 2048
      %48 = vsyncadd [#allocation6], %s47
      %s49 = sshll.u32 [#allocation7], 4
      %s50 = int_to_ptr.vmem [resolvable:$true] %s49
      %55 = dma.hbm_to_vmem [thread:$0]  %s3, 2048, %s50, [#allocation6], 128, 128, 8
    $region17: #{tpu_custom_call.1} parent=1 // pred_fallthru
      _
    // Predicated region
    $region18: #{tpu_custom_call.1} parent=1 // pred_check
      _
    $region19: #{tpu_custom_call.1} parent=1 // pred_check_branch
      %57 = sbr.rel (0) target = $region21
    $region20: #{tpu_custom_call.1} parent=1 // pred_region
      _
    $region21: #{tpu_custom_call.1} parent=1 // pred_fallthru
      _
    // Predicated region
    $region22: #{tpu_custom_call.1} parent=1 // pred_check
      _
    $region23: #{tpu_custom_call.1} parent=1 // pred_check_branch
      %59 = sbr.rel (0) target = $region25
    $region24: #{tpu_custom_call.1} parent=1 // pred_region
      %s61 = ssub.s32 2048, 2048
      %62 = vsyncadd [#allocation9], %s61
      %s63 = sshll.u32 [#allocation8], 4
      %s64 = int_to_ptr.vmem [resolvable:$true] %s63
      %69 = dma.hbm_to_vmem [thread:$0]  %s5, 2048, %s64, [#allocation9], 64, 64, 4
    $region25: #{tpu_custom_call.1} parent=1 // pred_fallthru
      _
    // Predicated region
    $region26: #{tpu_custom_call.1} parent=1 // pred_check
      _
    $region27: #{tpu_custom_call.1} parent=1 // pred_check_branch
      %71 = sbr.rel (0) target = $region29
    $region28: #{tpu_custom_call.1} parent=1 // pred_region
      _
    $region29: #{tpu_custom_call.1} parent=1 // pred_fallthru
      _
    // Predicated region
    $region30: #{tpu_custom_call.1} parent=1 // pred_check
      _
    $region31: #{tpu_custom_call.1} parent=1 // pred_check_branch
      %73 = sbr.rel (0) target = $region33
    $region32: #{tpu_custom_call.1} parent=1 // pred_region
      %s75 = ssub.s32 1024, 1024
      %76 = vsyncadd [#allocation9], %s75
      %s77 = sshll.u32 [#allocation10], 4
      %s78 = int_to_ptr.vmem [resolvable:$true] %s77
      %83 = dma.hbm_to_vmem [thread:$0]  %s7, 1024, %s78, [#allocation9], 64, 64, 4
    $region33: #{tpu_custom_call.1} parent=1 // pred_fallthru
      _
    // Predicated region
    $region34: #{tpu_custom_call.1} parent=1 // pred_check
      _
    $region35: #{tpu_custom_call.1} parent=1 // pred_check_branch
      %85 = sbr.rel (0) target = $region37
    $region36: #{tpu_custom_call.1} parent=1 // pred_region
      _
    $region37: #{tpu_custom_call.1} parent=1 // pred_fallthru
      _
    // Predicated region
    $region38: #{tpu_custom_call.1} parent=1 // pred_check
      _
    $region39: #{tpu_custom_call.1} parent=1 // pred_check_branch
      %87 = sbr.rel (0) target = $region41
    $region40: #{tpu_custom_call.1} parent=1 // pred_region
      %88 = dma.done [#allocation3], 128
    $region41: #{tpu_custom_call.1} parent=1 // pred_fallthru
      _
    // Predicated region
    $region42: #{tpu_custom_call.1} parent=1 // pred_check
      _
    $region43: #{tpu_custom_call.1} parent=1 // pred_check_branch
      %90 = sbr.rel (0) target = $region45
    $region44: #{tpu_custom_call.1} parent=1 // pred_region
      %91 = dma.done [#allocation6], 128
    $region45: #{tpu_custom_call.1} parent=1 // pred_fallthru
      _
    // Predicated region
    $region46: #{tpu_custom_call.1} parent=1 // pred_check
      _
    $region47: #{tpu_custom_call.1} parent=1 // pred_check_branch
      %93 = sbr.rel (0) target = $region49
    $region48: #{tpu_custom_call.1} parent=1 // pred_region
      %94 = dma.done [#allocation6], 2048
    $region49: #{tpu_custom_call.1} parent=1 // pred_fallthru
      _
    // Predicated region
    $region50: #{tpu_custom_call.1} parent=1 // pred_check
      _
    $region51: #{tpu_custom_call.1} parent=1 // pred_check_branch
      %96 = sbr.rel (0) target = $region53
    $region52: #{tpu_custom_call.1} parent=1 // pred_region
      %97 = dma.done [#allocation9], 2048
    $region53: #{tpu_custom_call.1} parent=1 // pred_fallthru
      _
    // Predicated region
    $region54: #{tpu_custom_call.1} parent=1 // pred_check
      _
    $region55: #{tpu_custom_call.1} parent=1 // pred_check_branch
      %99 = sbr.rel (0) target = $region57
    $region56: #{tpu_custom_call.1} parent=1 // pred_region
      %100 = dma.done [#allocation9], 1024
    $region57: #{tpu_custom_call.1} parent=1 // pred_fallthru
      _
    %v102 = vld [vmem:[#allocation2] sm:$0xf]
    %v103 = vld [vmem:[#allocation2 + $0x4] sm:$0xf]
    %v104 = vld [vmem:[#allocation5] sm:$0xf]
    %v105 = vld [vmem:[#allocation5 + $0x4] sm:$0xf]
    %v106 = vld [vmem:[%s2] sm:$0x1]
    %v108 = vlaneseq
    %v109 = vshrl.u32 %v108, 7
    %v110 = vsub.s32 0, %v109
    %v111 = vrot.slane %v106, %v110
    %v115 = vunpack.c.l.b16 %v102
    %v116 = vunpack.c.l.b16 %v103
    %v117 = vpack.c.b16 %v116, %v115
    %v120 = vunpack.c.l.b16 %v104
    %v121 = vunpack.c.l.b16 %v105
    %v122 = vpack.c.b16 %v121, %v120
    %vm124 = vcmask 130048
    %v126 = vsel %vm124, %v117, 0
    %128 = vmatprep.subr.bf16.mxu0 0
    %129 = vmatpush1.bf16.msra.mxu0 %v122
    %130 = vmatprep.subr.bf16.mxu0 0
    %131 = vmatpush1.bf16.msra.mxu0 0
    %132 = vmatprep.subr.bf16.mxu0 0
    %133 = vmatpush1.bf16.msra.mxu0 0
    %134 = vmatprep.subr.bf16.mxu0 0
    %135 = vmatpush1.bf16.msra.mxu0 0
    %136 = vmatprep.subr.bf16.mxu0 0
    %137 = vmatpush1.bf16.msra.mxu0 0
    %138 = vmatprep.subr.bf16.mxu0 0
    %139 = vmatpush1.bf16.msra.mxu0 0
    %140 = vmatprep.subr.bf16.mxu0 0
    %141 = vmatpush1.bf16.msra.mxu0 0
    %142 = vmatprep.subr.bf16.mxu0 0
    %143 = vmatpush1.bf16.msra.mxu0 0
    %144 = vmatprep.subr.bf16.mxu0 0
    %145 = vmatpush1.bf16.msra.mxu0 0
    %146 = vmatprep.subr.bf16.mxu0 0
    %147 = vmatpush1.bf16.msra.mxu0 0
    %148 = vmatprep.subr.bf16.mxu0 0
    %149 = vmatpush1.bf16.msra.mxu0 0
    %150 = vmatprep.subr.bf16.mxu0 0
    %151 = vmatpush1.bf16.msra.mxu0 0
    %152 = vmatprep.subr.bf16.mxu0 0
    %153 = vmatpush1.bf16.msra.mxu0 0
    %154 = vmatprep.subr.bf16.mxu0 0
    %155 = vmatpush1.bf16.msra.mxu0 0
    %156 = vmatprep.subr.bf16.mxu0 0
    %157 = vmatpush1.bf16.msra.mxu0 0
    %158 = vmatprep.subr.bf16.mxu0 0
    %159 = vmatpush1.bf16.msra.mxu0 0
    %160 = vmatprep.mubr.bf16.mxu0 0
    %161 = vmatmul.mubr.bf16.gmra.mrb[0].mxu0 %v126
    %v162 = vpop.f32.mrb[0].mxu0
    %v163 = vadd.f32 %v111, %v162
    %v164 = vpop.f32.mrb[0].mxu0
    %v165 = vpop.f32.mrb[0].mxu0
    %v166 = vadd.f32 %v111, %v165
    %v167 = vpop.f32.mrb[0].mxu0
    %168 = vdwg.mxu0
    %v169 = vmax.f32 %v163, 0.0
    %v170 = vmax.f32 %v166, 0.0
    %v171 = vpack.c.bf16 %v170, %v169
    %v172 = vld [vmem:[#allocation7] sm:$0xff]
    %v173 = vld [vmem:[#allocation7 + $0x8] sm:$0xff]
    %v174 = vld [vmem:[#allocation7 + $0x10] sm:$0xff]
    %v175 = vld [vmem:[#allocation7 + $0x18] sm:$0xff]
    %v176 = vld [vmem:[#allocation7 + $0x20] sm:$0xff]
    %v177 = vld [vmem:[#allocation7 + $0x28] sm:$0xff]
    %v178 = vld [vmem:[#allocation7 + $0x30] sm:$0xff]
    %v179 = vld [vmem:[#allocation7 + $0x38] sm:$0xff]
    %v180 = vld [vmem:[#allocation7 + $0x40] sm:$0xff]
    %v181 = vld [vmem:[#allocation7 + $0x48] sm:$0xff]
    %v182 = vld [vmem:[#allocation7 + $0x50] sm:$0xff]
    %v183 = vld [vmem:[#allocation7 + $0x58] sm:$0xff]
    %v184 = vld [vmem:[#allocation7 + $0x60] sm:$0xff]
    %v185 = vld [vmem:[#allocation7 + $0x68] sm:$0xff]
    %v186 = vld [vmem:[#allocation7 + $0x70] sm:$0xff]
    %v187 = vld [vmem:[#allocation7 + $0x78] sm:$0xff]
    %v188 = vld [vmem:[%s4] sm:$0x3]
    %v190 = vlaneseq
    %v191 = vshrl.u32 %v190, 7
    %v192 = vsub.s32 0, %v191
    %v193 = vrot.slane %v188, %v192
    %v194 = vlaneseq
    %v195 = vshrl.u32 %v194, 7
    %v196 = vsub.s32 1, %v195
    %v197 = vrot.slane %v188, %v196
    %v216 = vunpack.c.l.b16 %v172
    %v217 = vunpack.c.h.b16 %v172
    %v218 = vunpack.c.l.b16 %v173
    %v219 = vunpack.c.h.b16 %v173
    %v220 = vunpack.c.l.b16 %v174
    %v221 = vunpack.c.h.b16 %v174
    %v222 = vunpack.c.l.b16 %v175
    %v223 = vunpack.c.h.b16 %v175
    %v224 = vunpack.c.l.b16 %v176
    %v225 = vunpack.c.h.b16 %v176
    %v226 = vunpack.c.l.b16 %v177
    %v227 = vunpack.c.h.b16 %v177
    %v228 = vunpack.c.l.b16 %v178
    %v229 = vunpack.c.h.b16 %v178
    %v230 = vunpack.c.l.b16 %v179
    %v231 = vunpack.c.h.b16 %v179
    %v232 = vunpack.c.l.b16 %v180
    %v233 = vunpack.c.h.b16 %v180
    %v234 = vunpack.c.l.b16 %v181
    %v235 = vunpack.c.h.b16 %v181
    %v236 = vunpack.c.l.b16 %v182
    %v237 = vunpack.c.h.b16 %v182
    %v238 = vunpack.c.l.b16 %v183
    %v239 = vunpack.c.h.b16 %v183
    %v240 = vunpack.c.l.b16 %v184
    %v241 = vunpack.c.h.b16 %v184
    %v242 = vunpack.c.l.b16 %v185
    %v243 = vunpack.c.h.b16 %v185
    %v244 = vunpack.c.l.b16 %v186
    %v245 = vunpack.c.h.b16 %v186
    %v246 = vunpack.c.l.b16 %v187
    %v247 = vunpack.c.h.b16 %v187
    %v248 = vpack.c.b16 %v218, %v216
    %v249 = vpack.c.b16 %v219, %v217
    %v250 = vpack.c.b16 %v222, %v220
    %v251 = vpack.c.b16 %v223, %v221
    %v252 = vpack.c.b16 %v226, %v224
    %v253 = vpack.c.b16 %v227, %v225
    %v254 = vpack.c.b16 %v230, %v228
    %v255 = vpack.c.b16 %v231, %v229
    %v256 = vpack.c.b16 %v234, %v232
    %v257 = vpack.c.b16 %v235, %v233
    %v258 = vpack.c.b16 %v238, %v236
    %v259 = vpack.c.b16 %v239, %v237
    %v260 = vpack.c.b16 %v242, %v240
    %v261 = vpack.c.b16 %v243, %v241
    %v262 = vpack.c.b16 %v246, %v244
    %v263 = vpack.c.b16 %v247, %v245
    %280 = vmatprep.subr.bf16.mxu0 %v249
    %281 = vmatpush1.bf16.msra.mxu0 %v248
    %282 = vmatprep.subr.bf16.mxu0 %v251
    %283 = vmatpush1.bf16.msra.mxu0 %v250
    %284 = vmatprep.subr.bf16.mxu0 %v253
    %285 = vmatpush1.bf16.msra.mxu0 %v252
    %286 = vmatprep.subr.bf16.mxu0 %v255
    %287 = vmatpush1.bf16.msra.mxu0 %v254
    %288 = vmatprep.subr.bf16.mxu0 %v257
    %289 = vmatpush1.bf16.msra.mxu0 %v256
    %290 = vmatprep.subr.bf16.mxu0 %v259
    %291 = vmatpush1.bf16.msra.mxu0 %v258
    %292 = vmatprep.subr.bf16.mxu0 %v261
    %293 = vmatpush1.bf16.msra.mxu0 %v260
    %294 = vmatprep.subr.bf16.mxu0 %v263
    %295 = vmatpush1.bf16.msra.mxu0 %v262
    %296 = vmatprep.subr.bf16.mxu0 0
    %297 = vmatpush1.bf16.msra.mxu0 0
    %298 = vmatprep.subr.bf16.mxu0 0
    %299 = vmatpush1.bf16.msra.mxu0 0
    %300 = vmatprep.subr.bf16.mxu0 0
    %301 = vmatpush1.bf16.msra.mxu0 0
    %302 = vmatprep.subr.bf16.mxu0 0
    %303 = vmatpush1.bf16.msra.mxu0 0
    %304 = vmatprep.subr.bf16.mxu0 0
    %305 = vmatpush1.bf16.msra.mxu0 0
    %306 = vmatprep.subr.bf16.mxu0 0
    %307 = vmatpush1.bf16.msra.mxu0 0
    %308 = vmatprep.subr.bf16.mxu0 0
    %309 = vmatpush1.bf16.msra.mxu0 0
    %310 = vmatprep.subr.bf16.mxu0 0
    %311 = vmatpush1.bf16.msra.mxu0 0
    %312 = vmatprep.mubr.bf16.mxu0 0
    %313 = vmatmul.mubr.bf16.gmra.mrb[0].mxu0 %v171
    %v314 = vpop.f32.mrb[0].mxu0
    %v315 = vadd.f32 %v193, %v314
    %v316 = vpop.f32.mrb[0].mxu0
    %v317 = vadd.f32 %v197, %v316
    %v318 = vpop.f32.mrb[0].mxu0
    %v319 = vadd.f32 %v193, %v318
    %v320 = vpop.f32.mrb[0].mxu0
    %v321 = vadd.f32 %v197, %v320
    %322 = vdwg.mxu0
    %v323 = vmax.f32 %v315, 0.0
    %v324 = vmax.f32 %v317, 0.0
    %v325 = vmax.f32 %v319, 0.0
    %v326 = vmax.f32 %v321, 0.0
    %v327 = vpack.c.bf16 %v325, %v323
    %v328 = vpack.c.bf16 %v326, %v324
    %v329 = vld [vmem:[#allocation8] sm:$0xf]
    %v330 = vld [vmem:[#allocation8 + $0x4] sm:$0xf]
    %v331 = vld [vmem:[#allocation8 + $0x8] sm:$0xf]
    %v332 = vld [vmem:[#allocation8 + $0xc] sm:$0xf]
    %v333 = vld [vmem:[#allocation8 + $0x10] sm:$0xf]
    %v334 = vld [vmem:[#allocation8 + $0x14] sm:$0xf]
    %v335 = vld [vmem:[#allocation8 + $0x18] sm:$0xf]
    %v336 = vld [vmem:[#allocation8 + $0x1c] sm:$0xf]
    %v337 = vld [vmem:[#allocation8 + $0x20] sm:$0xf]
    %v338 = vld [vmem:[#allocation8 + $0x24] sm:$0xf]
    %v339 = vld [vmem:[#allocation8 + $0x28] sm:$0xf]
    %v340 = vld [vmem:[#allocation8 + $0x2c] sm:$0xf]
    %v341 = vld [vmem:[#allocation8 + $0x30] sm:$0xf]
    %v342 = vld [vmem:[#allocation8 + $0x34] sm:$0xf]
    %v343 = vld [vmem:[#allocation8 + $0x38] sm:$0xf]
    %v344 = vld [vmem:[#allocation8 + $0x3c] sm:$0xf]
    %v345 = vld [vmem:[#allocation8 + $0x40] sm:$0xf]
    %v346 = vld [vmem:[#allocation8 + $0x44] sm:$0xf]
    %v347 = vld [vmem:[#allocation8 + $0x48] sm:$0xf]
    %v348 = vld [vmem:[#allocation8 + $0x4c] sm:$0xf]
    %v349 = vld [vmem:[#allocation8 + $0x50] sm:$0xf]
    %v350 = vld [vmem:[#allocation8 + $0x54] sm:$0xf]
    %v351 = vld [vmem:[#allocation8 + $0x58] sm:$0xf]
    %v352 = vld [vmem:[#allocation8 + $0x5c] sm:$0xf]
    %v353 = vld [vmem:[#allocation8 + $0x60] sm:$0xf]
    %v354 = vld [vmem:[#allocation8 + $0x64] sm:$0xf]
    %v355 = vld [vmem:[#allocation8 + $0x68] sm:$0xf]
    %v356 = vld [vmem:[#allocation8 + $0x6c] sm:$0xf]
    %v357 = vld [vmem:[#allocation8 + $0x70] sm:$0xf]
    %v358 = vld [vmem:[#allocation8 + $0x74] sm:$0xf]
    %v359 = vld [vmem:[#allocation8 + $0x78] sm:$0xf]
    %v360 = vld [vmem:[#allocation8 + $0x7c] sm:$0xf]
    %v361 = vld [vmem:[%s6] sm:$0x1]
    %v363 = vlaneseq
    %v364 = vshrl.u32 %v363, 7
    %v365 = vsub.s32 0, %v364
    %v366 = vrot.slane %v361, %v365
    %v400 = vunpack.c.l.b16 %v329
    %v401 = vunpack.c.l.b16 %v330
    %v402 = vunpack.c.l.b16 %v331
    %v403 = vunpack.c.l.b16 %v332
    %v404 = vunpack.c.l.b16 %v333
    %v405 = vunpack.c.l.b16 %v334
    %v406 = vunpack.c.l.b16 %v335
    %v407 = vunpack.c.l.b16 %v336
    %v408 = vunpack.c.l.b16 %v337
    %v409 = vunpack.c.l.b16 %v338
    %v410 = vunpack.c.l.b16 %v339
    %v411 = vunpack.c.l.b16 %v340
    %v412 = vunpack.c.l.b16 %v341
    %v413 = vunpack.c.l.b16 %v342
    %v414 = vunpack.c.l.b16 %v343
    %v415 = vunpack.c.l.b16 %v344
    %v416 = vunpack.c.l.b16 %v345
    %v417 = vunpack.c.l.b16 %v346
    %v418 = vunpack.c.l.b16 %v347
    %v419 = vunpack.c.l.b16 %v348
    %v420 = vunpack.c.l.b16 %v349
    %v421 = vunpack.c.l.b16 %v350
    %v422 = vunpack.c.l.b16 %v351
    %v423 = vunpack.c.l.b16 %v352
    %v424 = vunpack.c.l.b16 %v353
    %v425 = vunpack.c.l.b16 %v354
    %v426 = vunpack.c.l.b16 %v355
    %v427 = vunpack.c.l.b16 %v356
    %v428 = vunpack.c.l.b16 %v357
    %v429 = vunpack.c.l.b16 %v358
    %v430 = vunpack.c.l.b16 %v359
    %v431 = vunpack.c.l.b16 %v360
    %v432 = vpack.c.b16 %v401, %v400
    %v433 = vpack.c.b16 %v403, %v402
    %v434 = vpack.c.b16 %v405, %v404
    %v435 = vpack.c.b16 %v407, %v406
    %v436 = vpack.c.b16 %v409, %v408
    %v437 = vpack.c.b16 %v411, %v410
    %v438 = vpack.c.b16 %v413, %v412
    %v439 = vpack.c.b16 %v415, %v414
    %v440 = vpack.c.b16 %v417, %v416
    %v441 = vpack.c.b16 %v419, %v418
    %v442 = vpack.c.b16 %v421, %v420
    %v443 = vpack.c.b16 %v423, %v422
    %v444 = vpack.c.b16 %v425, %v424
    %v445 = vpack.c.b16 %v427, %v426
    %v446 = vpack.c.b16 %v429, %v428
    %v447 = vpack.c.b16 %v431, %v430
    %464 = vmatprep.subr.bf16.mxu0 0
    %465 = vmatpush1.bf16.msra.mxu0 %v432
    %466 = vmatprep.subr.bf16.mxu0 0
    %467 = vmatpush1.bf16.msra.mxu0 %v433
    %468 = vmatprep.subr.bf16.mxu0 0
    %469 = vmatpush1.bf16.msra.mxu0 %v434
    %470 = vmatprep.subr.bf16.mxu0 0
    %471 = vmatpush1.bf16.msra.mxu0 %v435
    %472 = vmatprep.subr.bf16.mxu0 0
    %473 = vmatpush1.bf16.msra.mxu0 %v436
    %474 = vmatprep.subr.bf16.mxu0 0
    %475 = vmatpush1.bf16.msra.mxu0 %v437
    %476 = vmatprep.subr.bf16.mxu0 0
    %477 = vmatpush1.bf16.msra.mxu0 %v438
    %478 = vmatprep.subr.bf16.mxu0 0
    %479 = vmatpush1.bf16.msra.mxu0 %v439
    %480 = vmatprep.subr.bf16.mxu0 0
    %481 = vmatpush1.bf16.msra.mxu0 %v440
    %482 = vmatprep.subr.bf16.mxu0 0
    %483 = vmatpush1.bf16.msra.mxu0 %v441
    %484 = vmatprep.subr.bf16.mxu0 0
    %485 = vmatpush1.bf16.msra.mxu0 %v442
    %486 = vmatprep.subr.bf16.mxu0 0
    %487 = vmatpush1.bf16.msra.mxu0 %v443
    %488 = vmatprep.subr.bf16.mxu0 0
    %489 = vmatpush1.bf16.msra.mxu0 %v444
    %490 = vmatprep.subr.bf16.mxu0 0
    %491 = vmatpush1.bf16.msra.mxu0 %v445
    %492 = vmatprep.subr.bf16.mxu0 0
    %493 = vmatpush1.bf16.msra.mxu0 %v446
    %494 = vmatprep.subr.bf16.mxu0 0
    %495 = vmatpush1.bf16.msra.mxu0 %v447
    %496 = vmatprep.mubr.bf16.mxu0 %v328
    %497 = vmatmul.mubr.bf16.gmra.mrb[0].mxu0 %v327
    %v498 = vpop.f32.mrb[0].mxu0
    %v499 = vadd.f32 %v366, %v498
    %v500 = vpop.f32.mrb[0].mxu0
    %v501 = vpop.f32.mrb[0].mxu0
    %v502 = vadd.f32 %v366, %v501
    %v503 = vpop.f32.mrb[0].mxu0
    %504 = vdwg.mxu0
    %v505 = vmax.f32 %v499, 0.0
    %v506 = vmax.f32 %v502, 0.0
    %v507 = vpack.c.bf16 %v506, %v505
    %v508 = vld [vmem:[#allocation10] sm:$0xf]
    %v509 = vld [vmem:[#allocation10 + $0x4] sm:$0xf]
    %v510 = vld [vmem:[#allocation10 + $0x8] sm:$0xf]
    %v511 = vld [vmem:[#allocation10 + $0xc] sm:$0xf]
    %v512 = vld [vmem:[#allocation10 + $0x10] sm:$0xf]
    %v513 = vld [vmem:[#allocation10 + $0x14] sm:$0xf]
    %v514 = vld [vmem:[#allocation10 + $0x18] sm:$0xf]
    %v515 = vld [vmem:[#allocation10 + $0x1c] sm:$0xf]
    %v516 = vld [vmem:[#allocation10 + $0x20] sm:$0xf]
    %v517 = vld [vmem:[#allocation10 + $0x24] sm:$0xf]
    %v518 = vld [vmem:[#allocation10 + $0x28] sm:$0xf]
    %v519 = vld [vmem:[#allocation10 + $0x2c] sm:$0xf]
    %v520 = vld [vmem:[#allocation10 + $0x30] sm:$0xf]
    %v521 = vld [vmem:[#allocation10 + $0x34] sm:$0xf]
    %v522 = vld [vmem:[#allocation10 + $0x38] sm:$0xf]
    %v523 = vld [vmem:[#allocation10 + $0x3c] sm:$0xf]
    %v524 = vld [vmem:[%s8] sm:$0x1]
    %v526 = vlaneseq
    %v527 = vshrl.u32 %v526, 7
    %v528 = vsub.s32 0, %v527
    %v529 = vrot.slane %v524, %v528
    %v547 = vunpack.c.l.b16 %v508
    %v548 = vunpack.c.l.b16 %v509
    %v549 = vunpack.c.l.b16 %v510
    %v550 = vunpack.c.l.b16 %v511
    %v551 = vunpack.c.l.b16 %v512
    %v552 = vunpack.c.l.b16 %v513
    %v553 = vunpack.c.l.b16 %v514
    %v554 = vunpack.c.l.b16 %v515
    %v555 = vunpack.c.l.b16 %v516
    %v556 = vunpack.c.l.b16 %v517
    %v557 = vunpack.c.l.b16 %v518
    %v558 = vunpack.c.l.b16 %v519
    %v559 = vunpack.c.l.b16 %v520
    %v560 = vunpack.c.l.b16 %v521
    %v561 = vunpack.c.l.b16 %v522
    %v562 = vunpack.c.l.b16 %v523
    %v563 = vpack.c.b16 %v548, %v547
    %v564 = vpack.c.b16 %v550, %v549
    %v565 = vpack.c.b16 %v552, %v551
    %v566 = vpack.c.b16 %v554, %v553
    %v567 = vpack.c.b16 %v556, %v555
    %v568 = vpack.c.b16 %v558, %v557
    %v569 = vpack.c.b16 %v560, %v559
    %v570 = vpack.c.b16 %v562, %v561
    %579 = vmatprep.subr.bf16.mxu0 0
    %580 = vmatpush1.bf16.msra.mxu0 %v563
    %581 = vmatprep.subr.bf16.mxu0 0
    %582 = vmatpush1.bf16.msra.mxu0 %v564
    %583 = vmatprep.subr.bf16.mxu0 0
    %584 = vmatpush1.bf16.msra.mxu0 %v565
    %585 = vmatprep.subr.bf16.mxu0 0
    %586 = vmatpush1.bf16.msra.mxu0 %v566
    %587 = vmatprep.subr.bf16.mxu0 0
    %588 = vmatpush1.bf16.msra.mxu0 %v567
    %589 = vmatprep.subr.bf16.mxu0 0
    %590 = vmatpush1.bf16.msra.mxu0 %v568
    %591 = vmatprep.subr.bf16.mxu0 0
    %592 = vmatpush1.bf16.msra.mxu0 %v569
    %593 = vmatprep.subr.bf16.mxu0 0
    %594 = vmatpush1.bf16.msra.mxu0 %v570
    %595 = vmatprep.subr.bf16.mxu0 0
    %596 = vmatpush1.bf16.msra.mxu0 0
    %597 = vmatprep.subr.bf16.mxu0 0
    %598 = vmatpush1.bf16.msra.mxu0 0
    %599 = vmatprep.subr.bf16.mxu0 0
    %600 = vmatpush1.bf16.msra.mxu0 0
    %601 = vmatprep.subr.bf16.mxu0 0
    %602 = vmatpush1.bf16.msra.mxu0 0
    %603 = vmatprep.subr.bf16.mxu0 0
    %604 = vmatpush1.bf16.msra.mxu0 0
    %605 = vmatprep.subr.bf16.mxu0 0
    %606 = vmatpush1.bf16.msra.mxu0 0
    %607 = vmatprep.subr.bf16.mxu0 0
    %608 = vmatpush1.bf16.msra.mxu0 0
    %609 = vmatprep.subr.bf16.mxu0 0
    %610 = vmatpush1.bf16.msra.mxu0 0
    %611 = vmatprep.mubr.bf16.mxu0 0
    %612 = vmatmul.mubr.bf16.gmra.mrb[0].mxu0 %v507
    %v613 = vpop.f32.mrb[0].mxu0
    %v614 = vadd.f32 %v529, %v613
    %v615 = vpop.f32.mrb[0].mxu0
    %v616 = vpop.f32.mrb[0].mxu0
    %v617 = vadd.f32 %v529, %v616
    %v618 = vpop.f32.mrb[0].mxu0
    %619 = vdwg.mxu0
    %v620 = vpack.c.bf16 %v617, %v614
    %v622 = vunpack.c.l.b16 %v620
    %v623 = vunpack.c.h.b16 %v620
    %v624 = vpack.c.b16 %v622, %v622
    %v625 = vpack.c.b16 %v623, %v623
    %628 = vst [vmem:[#allocation11] sm:$0xf] %v624
    %629 = vst [vmem:[#allocation11 + $0x4] sm:$0xf] %v625
    // Predicated region
    $region58: #{tpu_custom_call.1} parent=1 // pred_check
      _
    $region59: #{tpu_custom_call.1} parent=1 // pred_check_branch
      %631 = sbr.rel (0) target = $region61
    $region60: #{tpu_custom_call.1} parent=1 // pred_region
      %s633 = ssub.s32 128, 128
      %634 = vsyncadd [#allocation4], %s633
      %s635 = sshll.u32 [#allocation11], 4
      %s636 = int_to_ptr.vmem [resolvable:$true] %s635
      %641 = dma.vmem_to_hbm [thread:$0]  %s636, 128, %s9, [#allocation4], 64, 64, 4
    $region61: #{tpu_custom_call.1} parent=1 // pred_fallthru
      _
    // Predicated region
    $region62: #{tpu_custom_call.1} parent=1 // pred_check
      _
    $region63: #{tpu_custom_call.1} parent=1 // pred_check_branch
      %643 = sbr.rel (0) target = $region65
    $region64: #{tpu_custom_call.1} parent=1 // pred_region
      %644 = dma.done [#allocation4], 128
    $region65: #{tpu_custom_call.1} parent=1 // pred_fallthru
      _
    %645 = vsyncpa [#allocation3], 1
    %646 = vsyncpa [#allocation6], 1
    %647 = vsyncpa [#allocation9], 1
    %648 = vsyncpa [#allocation4], 1

</llo_original>
